<compile_context>
chip_gen: v5e
topology: v5e:2x2
jax: 0.10.0
libtpu: 0.0.40
codegen_flags: <defaults>
</compile_context>

<pallas_src>
import functools

import jax
import jax.numpy as jnp
from jax.experimental import pallas as pl
from jax.experimental.pallas import tpu as pltpu


def _round_up(n, m):
    return ((n + m - 1) // m) * m


def _cdiv(a, b):
    return -(-a // b)


# ----------------------------------------------------------------------------- kernel
def _mlp_kernel(x_ref,
                w1_ref, b1_ref,
                w2_ref, b2_ref,
                w3_ref, b3_ref,
                w4_ref, b4_ref,
                o_ref):
    # 4 fused matmuls: MXU does the dots (f32 accumulation), VPU bias+ReLU, EUP tanh.
    wdt = w1_ref.dtype                       # compute dtype of matmul operands
    x = x_ref[...].astype(wdt)               # f32 tile -> compute dtype, in-register

    h = jnp.dot(x, w1_ref[...], preferred_element_type=jnp.float32) + b1_ref[...]
    h = jnp.maximum(h, 0.0)

    h = jnp.dot(h.astype(wdt), w2_ref[...],
                preferred_element_type=jnp.float32) + b2_ref[...]
    h = jnp.maximum(h, 0.0)

    h = jnp.dot(h.astype(wdt), w3_ref[...],
                preferred_element_type=jnp.float32) + b3_ref[...]
    h = jnp.maximum(h, 0.0)

    h = jnp.dot(h.astype(wdt), w4_ref[...],
                preferred_element_type=jnp.float32) + b4_ref[...]
    o_ref[...] = jnp.tanh(h).astype(o_ref.dtype)


# ----------------------------------------------------------------------------- tiling
def _choose_tiling(batch, batch_tile, min_rows_for_split):
    """Adaptive batch tiling.

    - tile rows only need sublane (x8) alignment, not x128;
    - small batches -> single grid step (no per-step pipeline overhead);
    - batches >= min_rows_for_split -> even step count >= 2 so v7x's two
      TensorCores both get work under dimension_semantics=("parallel",).
    """
    b8 = _round_up(max(batch, 1), 8)
    n_steps = _cdiv(b8, batch_tile)
    if b8 >= min_rows_for_split:
        n_steps = max(n_steps, 2)
        if n_steps % 2:
            n_steps += 1
    tile = _round_up(_cdiv(b8, n_steps), 8)
    b_pad = tile * n_steps
    return tile, b_pad, n_steps


# ----------------------------------------------------------------------------- forward
@functools.partial(
    jax.jit,
    static_argnames=("out_dim", "batch_tile", "min_rows_for_split",
                     "vmem_limit_bytes"))
def _generator_forward(x, w1, b1, w2, b2, w3, b3, w4, b4, *,
                       out_dim, batch_tile, min_rows_for_split,
                       vmem_limit_bytes):
    B, in_dim = x.shape
    out_pad = w4.shape[1]                      # already padded to a multiple of 128
    tile, b_pad, n_steps = _choose_tiling(B, batch_tile, min_rows_for_split)

    # Batch-only padding of x (feature dim stays at in_dim; cast happens in-kernel).
    x_p = jnp.pad(x, ((0, b_pad - B), (0, 0))) if b_pad != B else x

    weights = (w1, b1, w2, b2, w3, b3, w4, b4)
    flops = 2 * b_pad * (in_dim * w1.shape[1]
                         + w2.shape[0] * w2.shape[1]
                         + w3.shape[0] * w3.shape[1]
                         + w4.shape[0] * out_pad)
    bytes_accessed = (x_p.size * x_p.dtype.itemsize
                      + sum(a.size * a.dtype.itemsize for a in weights)
                      + b_pad * out_pad * 4)
    cost = pl.CostEstimate(flops=int(flops),
                           transcendentals=int(b_pad * out_pad),
                           bytes_accessed=int(bytes_accessed))

    def const_spec(a):
        # Grid-invariant operand: same (0, 0) block every step -> fetched once.
        return pl.BlockSpec(a.shape, lambda i: (0, 0))

    out = pl.pallas_call(
        _mlp_kernel,
        out_shape=jax.ShapeDtypeStruct((b_pad, out_pad), jnp.float32),
        grid_spec=pltpu.PrefetchScalarGridSpec(
            num_scalar_prefetch=0,
            grid=(n_steps,),
            in_specs=[
                # x tile: last dim == full array dim (legal even if not x128).
                pl.BlockSpec((tile, in_dim), lambda i: (i, 0)),
                const_spec(w1), const_spec(b1),
                const_spec(w2), const_spec(b2),
                const_spec(w3), const_spec(b3),
                const_spec(w4), const_spec(b4),
            ],
            out_specs=pl.BlockSpec((tile, out_pad), lambda i: (i, 0)),
        ),
        compiler_params=pltpu.CompilerParams(
            dimension_semantics=("parallel",),   # shards steps over 2 TCs on v7x
            vmem_limit_bytes=vmem_limit_bytes,   # only needed if tile >> 1024 on v5e
        ),
        cost_estimate=cost,
    )(x_p, w1, b1, w2, b2, w3, b3, w4, b4)

    return out[:B, :out_dim]


# ----------------------------------------------------------------------------- params
def prepare_generator_params(params, compute_dtype=jnp.bfloat16):
    """One-time param conversion (hoisted out of the per-call path).

    Weights cast to `compute_dtype`, biases kept f32 as (1, n), and the final
    layer's output dim zero-padded to a lane-dense multiple of 128.
    """
    (w1, b1), (w2, b2), (w3, b3), (w4, b4) = params
    out_dim = w4.shape[1]
    out_pad = _round_up(out_dim, 128)

    def bias2d(b):
        return jnp.asarray(b, jnp.float32).reshape(1, -1)

    prepared = (
        jnp.asarray(w1, compute_dtype), bias2d(b1),
        jnp.asarray(w2, compute_dtype), bias2d(b2),
        jnp.asarray(w3, compute_dtype), bias2d(b3),
        jnp.pad(jnp.asarray(w4, compute_dtype), ((0, 0), (0, out_pad - out_dim))),
        jnp.pad(bias2d(b4), ((0, 0), (0, out_pad - out_dim))),
    )
    return prepared, out_dim


def make_generator(params, *, compute_dtype=jnp.bfloat16, batch_tile=1024,
                   min_rows_for_split=512, vmem_limit_bytes=None):
    """Returns forward(x) with params prepared once and the whole pass jitted."""
    prepared, out_dim = prepare_generator_params(params, compute_dtype)

    def forward(x):
        return _generator_forward(x, *prepared,
                                  out_dim=out_dim,
                                  batch_tile=batch_tile,
                                  min_rows_for_split=min_rows_for_split,
                                  vmem_limit_bytes=vmem_limit_bytes)
    return forward


def generator_forward(x, params, *, compute_dtype=jnp.bfloat16, batch_tile=1024,
                      min_rows_for_split=512, vmem_limit_bytes=None):
    """Convenience one-shot API (prefer make_generator for repeated calls)."""
    return make_generator(params, compute_dtype=compute_dtype,
                          batch_tile=batch_tile,
                          min_rows_for_split=min_rows_for_split,
                          vmem_limit_bytes=vmem_limit_bytes)(x)


def init_generator_params(key, input_dim, output_dim):
    """Deterministic init mirroring nn.Linear shapes (weights kept as (in, out))."""
    dims = [input_dim, 128, 256, 512, output_dim]
    params = []
    for li in range(4):
        k_w, k_b, key = jax.random.split(key, 3)
        fan_in, fan_out = dims[li], dims[li + 1]
        bound = 1.0 / jnp.sqrt(fan_in)
        w = jax.random.uniform(k_w, (fan_in, fan_out), jnp.float32, -bound, bound)
        b = jax.random.uniform(k_b, (1, fan_out), jnp.float32, -bound, bound)
        params.append((w, b))
    return params


def _reference_forward(x, params, compute_dtype=jnp.float32):
    h = x
    for li, (w, b) in enumerate(params):
        h = jnp.dot(h.astype(compute_dtype), w.astype(compute_dtype),
                    preferred_element_type=jnp.float32) + b.astype(jnp.float32)
        h = jnp.maximum(h, 0.0) if li < 3 else jnp.tanh(h)
    return h


if __name__ == "__main__":
    key = jax.random.PRNGKey(0)
    input_dim, output_dim = 32, 64

    k_x1, k_x2, k_p = jax.random.split(key, 3)
    params = init_generator_params(k_p, input_dim, output_dim)

    gen_bf16 = make_generator(params)                            # bf16 MXU path
    gen_f32 = make_generator(params, compute_dtype=jnp.float32)  # strict-parity path

    # Small batch (single grid step) and a non-multiple batch (adaptive tile=304).
    x_small = jax.random.normal(k_x1, (8, input_dim), jnp.float32)
    x_big = jax.random.normal(k_x2, (300, input_dim), jnp.float32)

    for x in (x_small, x_big):
        out = jax.block_until_ready(gen_bf16(x))
        assert out.shape == (x.shape[0], output_dim)

        ref_matched = _reference_forward(x, params, jnp.bfloat16)  # same bf16 casts
        ref_f32 = _reference_forward(x, params, jnp.float32)       # module semantics
        assert jnp.allclose(out, ref_matched, atol=2e-3, rtol=2e-3), \
            "mismatch vs bf16-matched reference"
        assert jnp.allclose(out, ref_f32, atol=5e-2, rtol=5e-2), \
            "mismatch vs f32 reference semantics"

        out32 = jax.block_until_ready(gen_f32(x))
        assert out32.shape == (x.shape[0], output_dim)
        assert jnp.allclose(out32, ref_f32, atol=5e-3, rtol=5e-3), \
            "f32 escape-hatch path mismatch vs f32 reference"

    print("KERNEL_OK")
</pallas_src>

<mosaic_0001>
module attributes {stable_mosaic.version = 11 : i64} {
  func.func @_mlp_kernel(%arg0: i32, %arg1: memref<8x32xf32, #tpu.memory_space<vmem>>, %arg2: memref<32x128xbf16, #tpu.memory_space<vmem>>, %arg3: memref<1x128xf32, #tpu.memory_space<vmem>>, %arg4: memref<128x256xbf16, #tpu.memory_space<vmem>>, %arg5: memref<1x256xf32, #tpu.memory_space<vmem>>, %arg6: memref<256x512xbf16, #tpu.memory_space<vmem>>, %arg7: memref<1x512xf32, #tpu.memory_space<vmem>>, %arg8: memref<512x128xbf16, #tpu.memory_space<vmem>>, %arg9: memref<1x128xf32, #tpu.memory_space<vmem>>, %arg10: memref<8x128xf32, #tpu.memory_space<vmem>>) attributes {dimension_semantics = [#tpu.dimension_semantics<parallel>], iteration_bounds = array<i64: 1>, scalar_prefetch = 0 : i64, scratch_operands = 0 : i64, tpu.core_type = #tpu.core_type<tc>, window_params = [{transform_indices = @transform_0, window_bounds = array<i64: 8, 32>}, {pipeline_mode = #tpu.pipeline_mode<synchronous>, transform_indices = @transform_1, window_bounds = array<i64: 32, 128>}, {pipeline_mode = #tpu.pipeline_mode<synchronous>, transform_indices = @transform_2, window_bounds = array<i64: 1, 128>}, {pipeline_mode = #tpu.pipeline_mode<synchronous>, transform_indices = @transform_3, window_bounds = array<i64: 128, 256>}, {pipeline_mode = #tpu.pipeline_mode<synchronous>, transform_indices = @transform_4, window_bounds = array<i64: 1, 256>}, {pipeline_mode = #tpu.pipeline_mode<synchronous>, transform_indices = @transform_5, window_bounds = array<i64: 256, 512>}, {pipeline_mode = #tpu.pipeline_mode<synchronous>, transform_indices = @transform_6, window_bounds = array<i64: 1, 512>}, {pipeline_mode = #tpu.pipeline_mode<synchronous>, transform_indices = @transform_7, window_bounds = array<i64: 512, 128>}, {pipeline_mode = #tpu.pipeline_mode<synchronous>, transform_indices = @transform_8, window_bounds = array<i64: 1, 128>}, {transform_indices = @transform_9, window_bounds = array<i64: 8, 128>}]} {
    %c0 = arith.constant 0 : index
    %c0_0 = arith.constant 0 : index
    %0 = vector.load %arg1[%c0, %c0_0] : memref<8x32xf32, #tpu.memory_space<vmem>>, vector<8x32xf32>
    %1 = arith.truncf %0 : vector<8x32xf32> to vector<8x32xbf16>
    %c0_1 = arith.constant 0 : index
    %c0_2 = arith.constant 0 : index
    %2 = vector.load %arg2[%c0_1, %c0_2] : memref<32x128xbf16, #tpu.memory_space<vmem>>, vector<32x128xbf16>
    %cst = arith.constant dense<0.000000e+00> : vector<8x128xf32>
    %3 = tpu.matmul %1, %2, %cst {dimension_numbers = #tpu.dot_dimension_numbers<[1], [0], [0], [1], [0, 0, 1, 1], [], []>} : vector<8x32xbf16>, vector<32x128xbf16>, vector<8x128xf32> -> vector<8x128xf32>
    %c0_3 = arith.constant 0 : index
    %c0_4 = arith.constant 0 : index
    %4 = vector.load %arg3[%c0_3, %c0_4] : memref<1x128xf32, #tpu.memory_space<vmem>>, vector<1x128xf32>
    %5 = vector.broadcast %4 : vector<1x128xf32> to vector<8x128xf32>
    %6 = arith.addf %3, %5 : vector<8x128xf32>
    %cst_5 = arith.constant 0.000000e+00 : f32
    %7 = vector.broadcast %cst_5 : f32 to vector<8x128xf32>
    %8 = arith.maximumf %6, %7 : vector<8x128xf32>
    %9 = arith.truncf %8 : vector<8x128xf32> to vector<8x128xbf16>
    %c0_6 = arith.constant 0 : index
    %c0_7 = arith.constant 0 : index
    %10 = vector.load %arg4[%c0_6, %c0_7] : memref<128x256xbf16, #tpu.memory_space<vmem>>, vector<128x256xbf16>
    %cst_8 = arith.constant dense<0.000000e+00> : vector<8x256xf32>
    %11 = tpu.matmul %9, %10, %cst_8 {dimension_numbers = #tpu.dot_dimension_numbers<[1], [0], [0], [1], [0, 0, 1, 1], [], []>} : vector<8x128xbf16>, vector<128x256xbf16>, vector<8x256xf32> -> vector<8x256xf32>
    %c0_9 = arith.constant 0 : index
    %c0_10 = arith.constant 0 : index
    %12 = vector.load %arg5[%c0_9, %c0_10] : memref<1x256xf32, #tpu.memory_space<vmem>>, vector<1x256xf32>
    %13 = vector.broadcast %12 : vector<1x256xf32> to vector<8x256xf32>
    %14 = arith.addf %11, %13 : vector<8x256xf32>
    %cst_11 = arith.constant 0.000000e+00 : f32
    %15 = vector.broadcast %cst_11 : f32 to vector<8x256xf32>
    %16 = arith.maximumf %14, %15 : vector<8x256xf32>
    %17 = arith.truncf %16 : vector<8x256xf32> to vector<8x256xbf16>
    %c0_12 = arith.constant 0 : index
    %c0_13 = arith.constant 0 : index
    %18 = vector.load %arg6[%c0_12, %c0_13] : memref<256x512xbf16, #tpu.memory_space<vmem>>, vector<256x512xbf16>
    %cst_14 = arith.constant dense<0.000000e+00> : vector<8x512xf32>
    %19 = tpu.matmul %17, %18, %cst_14 {dimension_numbers = #tpu.dot_dimension_numbers<[1], [0], [0], [1], [0, 0, 1, 1], [], []>} : vector<8x256xbf16>, vector<256x512xbf16>, vector<8x512xf32> -> vector<8x512xf32>
    %c0_15 = arith.constant 0 : index
    %c0_16 = arith.constant 0 : index
    %20 = vector.load %arg7[%c0_15, %c0_16] : memref<1x512xf32, #tpu.memory_space<vmem>>, vector<1x512xf32>
    %21 = vector.broadcast %20 : vector<1x512xf32> to vector<8x512xf32>
    %22 = arith.addf %19, %21 : vector<8x512xf32>
    %cst_17 = arith.constant 0.000000e+00 : f32
    %23 = vector.broadcast %cst_17 : f32 to vector<8x512xf32>
    %24 = arith.maximumf %22, %23 : vector<8x512xf32>
    %25 = arith.truncf %24 : vector<8x512xf32> to vector<8x512xbf16>
    %c0_18 = arith.constant 0 : index
    %c0_19 = arith.constant 0 : index
    %26 = vector.load %arg8[%c0_18, %c0_19] : memref<512x128xbf16, #tpu.memory_space<vmem>>, vector<512x128xbf16>
    %cst_20 = arith.constant dense<0.000000e+00> : vector<8x128xf32>
    %27 = tpu.matmul %25, %26, %cst_20 {dimension_numbers = #tpu.dot_dimension_numbers<[1], [0], [0], [1], [0, 0, 1, 1], [], []>} : vector<8x512xbf16>, vector<512x128xbf16>, vector<8x128xf32> -> vector<8x128xf32>
    %c0_21 = arith.constant 0 : index
    %c0_22 = arith.constant 0 : index
    %28 = vector.load %arg9[%c0_21, %c0_22] : memref<1x128xf32, #tpu.memory_space<vmem>>, vector<1x128xf32>
    %29 = vector.broadcast %28 : vector<1x128xf32> to vector<8x128xf32>
    %30 = arith.addf %27, %29 : vector<8x128xf32>
    %31 = math.tanh %30 : vector<8x128xf32>
    %c0_23 = arith.constant 0 : index
    %c0_24 = arith.constant 0 : index
    %32 = vector.load %arg10[%c0_23, %c0_24] : memref<8x128xf32, #tpu.memory_space<vmem>>, vector<8x128xf32>
    tpu.vector_store %arg10[%c0_23, %c0_24], %31 {strides = array<i32>} : memref<8x128xf32, #tpu.memory_space<vmem>>, vector<8x128xf32>,
    return
  }
  func.func @transform_0(%arg0: i32) -> (i32, i32) {
    %c0_i32 = arith.constant 0 : i32
    %c0_i32_0 = arith.constant 0 : i32
    return %arg0, %c0_i32 : i32, i32
  }
  func.func @transform_1(%arg0: i32) -> (i32, i32) {
    %c0_i32 = arith.constant 0 : i32
    %c0_i32_0 = arith.constant 0 : i32
    %c0_i32_1 = arith.constant 0 : i32
    return %c0_i32, %c0_i32_0 : i32, i32
  }
  func.func @transform_2(%arg0: i32) -> (i32, i32) {
    %c0_i32 = arith.constant 0 : i32
    %c0_i32_0 = arith.constant 0 : i32
    %c0_i32_1 = arith.constant 0 : i32
    return %c0_i32, %c0_i32_0 : i32, i32
  }
  func.func @transform_3(%arg0: i32) -> (i32, i32) {
    %c0_i32 = arith.constant 0 : i32
    %c0_i32_0 = arith.constant 0 : i32
    %c0_i32_1 = arith.constant 0 : i32
    return %c0_i32, %c0_i32_0 : i32, i32
  }
  func.func @transform_4(%arg0: i32) -> (i32, i32) {
    %c0_i32 = arith.constant 0 : i32
    %c0_i32_0 = arith.constant 0 : i32
    %c0_i32_1 = arith.constant 0 : i32
    return %c0_i32, %c0_i32_0 : i32, i32
  }
  func.func @transform_5(%arg0: i32) -> (i32, i32) {
    %c0_i32 = arith.constant 0 : i32
    %c0_i32_0 = arith.constant 0 : i32
    %c0_i32_1 = arith.constant 0 : i32
    return %c0_i32, %c0_i32_0 : i32, i32
  }
  func.func @transform_6(%arg0: i32) -> (i32, i32) {
    %c0_i32 = arith.constant 0 : i32
    %c0_i32_0 = arith.constant 0 : i32
    %c0_i32_1 = arith.constant 0 : i32
    return %c0_i32, %c0_i32_0 : i32, i32
  }
  func.func @transform_7(%arg0: i32) -> (i32, i32) {
    %c0_i32 = arith.constant 0 : i32
    %c0_i32_0 = arith.constant 0 : i32
    %c0_i32_1 = arith.constant 0 : i32
    return %c0_i32, %c0_i32_0 : i32, i32
  }
  func.func @transform_8(%arg0: i32) -> (i32, i32) {
    %c0_i32 = arith.constant 0 : i32
    %c0_i32_0 = arith.constant 0 : i32
    %c0_i32_1 = arith.constant 0 : i32
    return %c0_i32, %c0_i32_0 : i32, i32
  }
  func.func @transform_9(%arg0: i32) -> (i32, i32) {
    %c0_i32 = arith.constant 0 : i32
    %c0_i32_0 = arith.constant 0 : i32
    return %arg0, %c0_i32 : i32, i32
  }
}

</mosaic_0001>

<llo_original>
// kernel: _generator_forward.1
$region0: #{_generator_forward.1}
  #allocation0 [shape = 'u32[]', space=smem, size = 0x4, offset = 0x4, fixed_abs, tag = 'smem constant byte address 0x4 - core index']
  #allocation1 [shape = 'u32[72,128]{1,0:T(1,128)}', space=vmem, size = 0x9000, scoped, tag = 'internal scratch']
  %s0 = inlined_call_operand.hbm [shape: f32[8,32], index: 0, kind: input, shape index: {}]
  %s1 = inlined_call_operand.hbm [shape: bf16[32,128], index: 1, kind: input, shape index: {}]
  %s2 = inlined_call_operand.vmem [shape: f32[1,128], index: 2, kind: input, shape index: {}]
  %s3 = inlined_call_operand.hbm [shape: bf16[128,256], index: 3, kind: input, shape index: {}]
  %s4 = inlined_call_operand.hbm [shape: f32[1,256], index: 4, kind: input, shape index: {}]
  %s5 = inlined_call_operand.hbm [shape: bf16[256,512], index: 5, kind: input, shape index: {}]
  %s6 = inlined_call_operand.vmem [shape: f32[1,512], index: 6, kind: input, shape index: {}]
  %s7 = inlined_call_operand.hbm [shape: bf16[512,128], index: 7, kind: input, shape index: {}]
  %s8 = inlined_call_operand.vmem [shape: f32[1,128], index: 8, kind: input, shape index: {}]
  %s9 = inlined_call_operand.hbm [shape: f32[8,128], index: 9, kind: output, shape index: {}]
  %s10 = sld [smem:[#allocation0]]
  $region70: #{_generator_forward.1} parent=0
    _
  %s12 = ssub.s32 1, %s10
  %s13 = scalar_select 0, %s12, %s10
  $region1: #{_generator_forward.1} parent=0
    #allocation2 [shape = 'u8[4096]{0}', space=vmem, size = 0x1000, scoped, tag = 'input window, operand 0, single buffered']
    #allocation3 [shape = 's32[1]{0}', space=sflag, size = 0x4, scoped, tag = 'scoped memory for _generator_forward.1']
    #allocation4 [shape = 's32[1]{0}', space=sflag, size = 0x4, scoped, tag = 'scoped memory for _generator_forward.1']
    #allocation5 [shape = 'u8[8192]{0}', space=vmem, size = 0x2000, scoped, tag = 'input window, operand 1, single buffered']
    #allocation6 [shape = 's32[1]{0}', space=sflag, size = 0x4, scoped, tag = 'scoped memory for _generator_forward.1']
    #allocation7 [shape = 'u8[65536]{0}', space=vmem, size = 0x10000, scoped, tag = 'input window, operand 3, single buffered']
    #allocation8 [shape = 'u8[1024]{0}', space=vmem, size = 0x400, scoped, tag = 'input window, operand 4, single buffered']
    #allocation9 [shape = 's32[1]{0}', space=sflag, size = 0x4, scoped, tag = 'scoped memory for _generator_forward.1']
    #allocation10 [shape = 'u8[262144]{0}', space=vmem, size = 0x40000, scoped, tag = 'input window, operand 5, single buffered']
    #allocation11 [shape = 'u8[131072]{0}', space=vmem, size = 0x20000, scoped, tag = 'input window, operand 7, single buffered']
    #allocation12 [shape = 's32[1]{0}', space=sflag, size = 0x4, scoped, tag = 'scoped memory for _generator_forward.1']
    #allocation13 [shape = 'u8[4096]{0}', space=vmem, size = 0x1000, scoped, tag = 'output window, operand 0, single buffered']
    %14 = vsyncpa [#allocation3], 0
    %15 = vsyncpa [#allocation6], 0
    %16 = vsyncpa [#allocation9], 0
    %17 = vsyncpa [#allocation12], 0
    %18 = vsyncpa [#allocation4], 0
    // Predicated region
    $region2: #{_generator_forward.1} parent=1 // pred_check
      _
    $region3: #{_generator_forward.1} parent=1 // pred_check_branch
      %20 = sbr.rel (0) target = $region5
    $region4: #{_generator_forward.1} parent=1 // pred_region
      %22 = vsyncadd [#allocation3], 0
      %s24 = sshll.u32 %s0, 4
      %s25 = int_to_ptr.hbm [resolvable:$true] %s24
      %s26 = sshll.u32 [#allocation2], 4
      %s27 = int_to_ptr.vmem [resolvable:$true] %s26
      %29 = dma.hbm_to_vmem [thread:$0]  %s25, 128, %s27, [#allocation3]
    $region5: #{_generator_forward.1} parent=1 // pred_fallthru
      _
    // Predicated region
    $region6: #{_generator_forward.1} parent=1 // pred_check
      _
    $region7: #{_generator_forward.1} parent=1 // pred_check_branch
      %31 = sbr.rel (0) target = $region9
    $region8: #{_generator_forward.1} parent=1 // pred_region
      %33 = vsyncadd [#allocation6], 0
      %s34 = sshll.u32 %s1, 4
      %s35 = int_to_ptr.hbm [resolvable:$true] %s34
      %s36 = sshll.u32 [#allocation5], 4
      %s37 = int_to_ptr.vmem [resolvable:$true] %s36
      %42 = dma.hbm_to_vmem [thread:$0]  %s35, 256, %s37, [#allocation6], 64, 64, 4
    $region9: #{_generator_forward.1} parent=1 // pred_fallthru
      _
    // Predicated region
    $region10: #{_generator_forward.1} parent=1 // pred_check
      _
    $region11: #{_generator_forward.1} parent=1 // pred_check_branch
      %44 = sbr.rel (0) target = $region13
    $region12: #{_generator_forward.1} parent=1 // pred_region
      _
    $region13: #{_generator_forward.1} parent=1 // pred_fallthru
      _
    // Predicated region
    $region14: #{_generator_forward.1} parent=1 // pred_check
      _
    $region15: #{_generator_forward.1} parent=1 // pred_check_branch
      %46 = sbr.rel (0) target = $region17
    $region16: #{_generator_forward.1} parent=1 // pred_region
      %48 = vsyncadd [#allocation6], 0
      %s49 = sshll.u32 %s3, 4
      %s50 = int_to_ptr.hbm [resolvable:$true] %s49
      %s51 = sshll.u32 [#allocation7], 4
      %s52 = int_to_ptr.vmem [resolvable:$true] %s51
      %57 = dma.hbm_to_vmem [thread:$0]  %s50, 2048, %s52, [#allocation6], 128, 128, 8
    $region17: #{_generator_forward.1} parent=1 // pred_fallthru
      _
    // Predicated region
    $region18: #{_generator_forward.1} parent=1 // pred_check
      _
    $region19: #{_generator_forward.1} parent=1 // pred_check_branch
      %59 = sbr.rel (0) target = $region21
    $region20: #{_generator_forward.1} parent=1 // pred_region
      %61 = vsyncadd [#allocation9], 0
      %s63 = sshll.u32 %s4, 4
      %s64 = int_to_ptr.hbm [resolvable:$true] %s63
      %s65 = sshll.u32 [#allocation8], 4
      %s66 = int_to_ptr.vmem [resolvable:$true] %s65
      %68 = dma.hbm_to_vmem [thread:$0]  %s64, 32, %s66, [#allocation9]
    $region21: #{_generator_forward.1} parent=1 // pred_fallthru
      _
    // Predicated region
    $region22: #{_generator_forward.1} parent=1 // pred_check
      _
    $region23: #{_generator_forward.1} parent=1 // pred_check_branch
      %70 = sbr.rel (0) target = $region25
    $region24: #{_generator_forward.1} parent=1 // pred_region
      %72 = vsyncadd [#allocation9], 0
      %s73 = sshll.u32 %s5, 4
      %s74 = int_to_ptr.hbm [resolvable:$true] %s73
      %s75 = sshll.u32 [#allocation10], 4
      %s76 = int_to_ptr.vmem [resolvable:$true] %s75
      %81 = dma.hbm_to_vmem [thread:$0]  %s74, 8192, %s76, [#allocation9], 256, 256, 16
    $region25: #{_generator_forward.1} parent=1 // pred_fallthru
      _
    // Predicated region
    $region26: #{_generator_forward.1} parent=1 // pred_check
      _
    $region27: #{_generator_forward.1} parent=1 // pred_check_branch
      %83 = sbr.rel (0) target = $region29
    $region28: #{_generator_forward.1} parent=1 // pred_region
      _
    $region29: #{_generator_forward.1} parent=1 // pred_fallthru
      _
    // Predicated region
    $region30: #{_generator_forward.1} parent=1 // pred_check
      _
    $region31: #{_generator_forward.1} parent=1 // pred_check_branch
      %85 = sbr.rel (0) target = $region33
    $region32: #{_generator_forward.1} parent=1 // pred_region
      %87 = vsyncadd [#allocation12], 0
      %s88 = sshll.u32 %s7, 4
      %s89 = int_to_ptr.hbm [resolvable:$true] %s88
      %s90 = sshll.u32 [#allocation11], 4
      %s91 = int_to_ptr.vmem [resolvable:$true] %s90
      %96 = dma.hbm_to_vmem [thread:$0]  %s89, 4096, %s91, [#allocation12], 64, 64, 4
    $region33: #{_generator_forward.1} parent=1 // pred_fallthru
      _
    // Predicated region
    $region34: #{_generator_forward.1} parent=1 // pred_check
      _
    $region35: #{_generator_forward.1} parent=1 // pred_check_branch
      %98 = sbr.rel (0) target = $region37
    $region36: #{_generator_forward.1} parent=1 // pred_region
      _
    $region37: #{_generator_forward.1} parent=1 // pred_fallthru
      _
    // Predicated region
    $region38: #{_generator_forward.1} parent=1 // pred_check
      _
    $region39: #{_generator_forward.1} parent=1 // pred_check_branch
      %100 = sbr.rel (0) target = $region41
    $region40: #{_generator_forward.1} parent=1 // pred_region
      %102 = dma.done [#allocation3], 128
    $region41: #{_generator_forward.1} parent=1 // pred_fallthru
      _
    // Predicated region
    $region42: #{_generator_forward.1} parent=1 // pred_check
      _
    $region43: #{_generator_forward.1} parent=1 // pred_check_branch
      %104 = sbr.rel (0) target = $region45
    $region44: #{_generator_forward.1} parent=1 // pred_region
      %106 = dma.done [#allocation6], 256
    $region45: #{_generator_forward.1} parent=1 // pred_fallthru
      _
    // Predicated region
    $region46: #{_generator_forward.1} parent=1 // pred_check
      _
    $region47: #{_generator_forward.1} parent=1 // pred_check_branch
      %108 = sbr.rel (0) target = $region49
    $region48: #{_generator_forward.1} parent=1 // pred_region
      %110 = dma.done [#allocation6], 2048
    $region49: #{_generator_forward.1} parent=1 // pred_fallthru
      _
    // Predicated region
    $region50: #{_generator_forward.1} parent=1 // pred_check
      _
    $region51: #{_generator_forward.1} parent=1 // pred_check_branch
      %112 = sbr.rel (0) target = $region53
    $region52: #{_generator_forward.1} parent=1 // pred_region
      %114 = dma.done [#allocation9], 32
    $region53: #{_generator_forward.1} parent=1 // pred_fallthru
      _
    // Predicated region
    $region54: #{_generator_forward.1} parent=1 // pred_check
      _
    $region55: #{_generator_forward.1} parent=1 // pred_check_branch
      %116 = sbr.rel (0) target = $region57
    $region56: #{_generator_forward.1} parent=1 // pred_region
      %118 = dma.done [#allocation9], 8192
    $region57: #{_generator_forward.1} parent=1 // pred_fallthru
      _
    // Predicated region
    $region58: #{_generator_forward.1} parent=1 // pred_check
      _
    $region59: #{_generator_forward.1} parent=1 // pred_check_branch
      %120 = sbr.rel (0) target = $region61
    $region60: #{_generator_forward.1} parent=1 // pred_region
      %122 = dma.done [#allocation12], 4096
    $region61: #{_generator_forward.1} parent=1 // pred_fallthru
      _
    %v124 = vld [vmem:[#allocation2] sm:$0xff]
    %v125 = vpack.c.bf16 %v124, %v124
    %v126 = vld [vmem:[#allocation5] sm:$0xf]
    %v127 = vld [vmem:[#allocation5 + $0x4] sm:$0xf]
    %v128 = vld [vmem:[#allocation5 + $0x8] sm:$0xf]
    %v129 = vld [vmem:[#allocation5 + $0xc] sm:$0xf]
    %v130 = vld [vmem:[%s2] sm:$0x1]
    %v132 = vperm.slane %v130, 0
    %v138 = vunpack.c.l.b16 %v126
    %v139 = vunpack.c.l.b16 %v127
    %v140 = vunpack.c.l.b16 %v128
    %v141 = vunpack.c.l.b16 %v129
    %v142 = vpack.c.b16 %v139, %v138
    %v143 = vpack.c.b16 %v141, %v140
    %vm146 = vcmask 261120
    %v148 = vsel %vm146, %v125, 0
    %150 = vmatpush.bf16.msra.mxu0 0
    %151 = vmatpush.bf16.msra.mxu0 0
    %152 = vmatpush.bf16.msra.mxu0 0
    %153 = vmatpush.bf16.msra.mxu0 0
    %154 = vmatpush.bf16.msra.mxu0 0
    %155 = vmatpush.bf16.msra.mxu0 0
    %156 = vmatpush.bf16.msra.mxu0 %v143
    %157 = vmatpush.bf16.msra.mxu0 %v142
    %158 = vmatmul.bf16.gmra.mxu0 %v148
    %v159 = vpop.f32.mrf.mxu0
    %v160 = vadd.f32 %v132, %v159
    %v161 = vpop.f32.mrf.mxu0
    %162 = vdwg.mxu0
    %v163 = vmax.f32 %v160, 0.0
    %v164 = vpack.c.bf16 %v163, %v163
    %v165 = vld [vmem:[#allocation7] sm:$0xff]
    %v166 = vld [vmem:[#allocation7 + $0x8] sm:$0xff]
    %v167 = vld [vmem:[#allocation7 + $0x10] sm:$0xff]
    %v168 = vld [vmem:[#allocation7 + $0x18] sm:$0xff]
    %v169 = vld [vmem:[#allocation7 + $0x20] sm:$0xff]
    %v170 = vld [vmem:[#allocation7 + $0x28] sm:$0xff]
    %v171 = vld [vmem:[#allocation7 + $0x30] sm:$0xff]
    %v172 = vld [vmem:[#allocation7 + $0x38] sm:$0xff]
    %v173 = vld [vmem:[#allocation7 + $0x40] sm:$0xff]
    %v174 = vld [vmem:[#allocation7 + $0x48] sm:$0xff]
    %v175 = vld [vmem:[#allocation7 + $0x50] sm:$0xff]
    %v176 = vld [vmem:[#allocation7 + $0x58] sm:$0xff]
    %v177 = vld [vmem:[#allocation7 + $0x60] sm:$0xff]
    %v178 = vld [vmem:[#allocation7 + $0x68] sm:$0xff]
    %v179 = vld [vmem:[#allocation7 + $0x70] sm:$0xff]
    %v180 = vld [vmem:[#allocation7 + $0x78] sm:$0xff]
    %v181 = vld [vmem:[#allocation8] sm:$0x3]
    %v183 = vperm.slane %v181, 0
    %v184 = vperm.slane %v181, 1
    %v203 = vunpack.c.l.b16 %v165
    %v204 = vunpack.c.h.b16 %v165
    %v205 = vunpack.c.l.b16 %v166
    %v206 = vunpack.c.h.b16 %v166
    %v207 = vunpack.c.l.b16 %v167
    %v208 = vunpack.c.h.b16 %v167
    %v209 = vunpack.c.l.b16 %v168
    %v210 = vunpack.c.h.b16 %v168
    %v211 = vunpack.c.l.b16 %v169
    %v212 = vunpack.c.h.b16 %v169
    %v213 = vunpack.c.l.b16 %v170
    %v214 = vunpack.c.h.b16 %v170
    %v215 = vunpack.c.l.b16 %v171
    %v216 = vunpack.c.h.b16 %v171
    %v217 = vunpack.c.l.b16 %v172
    %v218 = vunpack.c.h.b16 %v172
    %v219 = vunpack.c.l.b16 %v173
    %v220 = vunpack.c.h.b16 %v173
    %v221 = vunpack.c.l.b16 %v174
    %v222 = vunpack.c.h.b16 %v174
    %v223 = vunpack.c.l.b16 %v175
    %v224 = vunpack.c.h.b16 %v175
    %v225 = vunpack.c.l.b16 %v176
    %v226 = vunpack.c.h.b16 %v176
    %v227 = vunpack.c.l.b16 %v177
    %v228 = vunpack.c.h.b16 %v177
    %v229 = vunpack.c.l.b16 %v178
    %v230 = vunpack.c.h.b16 %v178
    %v231 = vunpack.c.l.b16 %v179
    %v232 = vunpack.c.h.b16 %v179
    %v233 = vunpack.c.l.b16 %v180
    %v234 = vunpack.c.h.b16 %v180
    %v235 = vpack.c.b16 %v205, %v203
    %v236 = vpack.c.b16 %v206, %v204
    %v237 = vpack.c.b16 %v209, %v207
    %v238 = vpack.c.b16 %v210, %v208
    %v239 = vpack.c.b16 %v213, %v211
    %v240 = vpack.c.b16 %v214, %v212
    %v241 = vpack.c.b16 %v217, %v215
    %v242 = vpack.c.b16 %v218, %v216
    %v243 = vpack.c.b16 %v221, %v219
    %v244 = vpack.c.b16 %v222, %v220
    %v245 = vpack.c.b16 %v225, %v223
    %v246 = vpack.c.b16 %v226, %v224
    %v247 = vpack.c.b16 %v229, %v227
    %v248 = vpack.c.b16 %v230, %v228
    %v249 = vpack.c.b16 %v233, %v231
    %v250 = vpack.c.b16 %v234, %v232
    %267 = vmatpush.bf16.msra.mxu0 %v249
    %268 = vmatpush.bf16.msra.mxu0 %v247
    %269 = vmatpush.bf16.msra.mxu0 %v245
    %270 = vmatpush.bf16.msra.mxu0 %v243
    %271 = vmatpush.bf16.msra.mxu0 %v241
    %272 = vmatpush.bf16.msra.mxu0 %v239
    %273 = vmatpush.bf16.msra.mxu0 %v237
    %274 = vmatpush.bf16.msra.mxu0 %v235
    %275 = vmatmul.bf16.gmra.mxu0 %v164
    %v276 = vpop.f32.mrf.mxu0
    %v277 = vadd.f32 %v183, %v276
    %v278 = vpop.f32.mrf.mxu0
    %279 = vdwg.mxu0
    %280 = vmatpush.bf16.msra.mxu0 %v250
    %281 = vmatpush.bf16.msra.mxu0 %v248
    %282 = vmatpush.bf16.msra.mxu0 %v246
    %283 = vmatpush.bf16.msra.mxu0 %v244
    %284 = vmatpush.bf16.msra.mxu0 %v242
    %285 = vmatpush.bf16.msra.mxu0 %v240
    %286 = vmatpush.bf16.msra.mxu0 %v238
    %287 = vmatpush.bf16.msra.mxu0 %v236
    %288 = vmatmul.bf16.gmra.mxu0 %v164
    %v289 = vpop.f32.mrf.mxu0
    %v290 = vadd.f32 %v184, %v289
    %v291 = vpop.f32.mrf.mxu0
    %292 = vdwg.mxu0
    %v293 = vmax.f32 %v277, 0.0
    %v294 = vmax.f32 %v290, 0.0
    %v295 = vpack.c.bf16 %v293, %v293
    %v296 = vpack.c.bf16 %v294, %v294
    %v297 = vld [vmem:[#allocation10] sm:$0xff]
    %v298 = vld [vmem:[#allocation10 + $0x8] sm:$0xff]
    %v299 = vld [vmem:[#allocation10 + $0x10] sm:$0xff]
    %v300 = vld [vmem:[#allocation10 + $0x18] sm:$0xff]
    %v301 = vld [vmem:[#allocation10 + $0x20] sm:$0xff]
    %v302 = vld [vmem:[#allocation10 + $0x28] sm:$0xff]
    %v303 = vld [vmem:[#allocation10 + $0x30] sm:$0xff]
    %v304 = vld [vmem:[#allocation10 + $0x38] sm:$0xff]
    %v305 = vld [vmem:[#allocation10 + $0x40] sm:$0xff]
    %v306 = vld [vmem:[#allocation10 + $0x48] sm:$0xff]
    %v307 = vld [vmem:[#allocation10 + $0x50] sm:$0xff]
    %v308 = vld [vmem:[#allocation10 + $0x58] sm:$0xff]
    %v309 = vld [vmem:[#allocation10 + $0x60] sm:$0xff]
    %v310 = vld [vmem:[#allocation10 + $0x68] sm:$0xff]
    %v311 = vld [vmem:[#allocation10 + $0x70] sm:$0xff]
    %v312 = vld [vmem:[#allocation10 + $0x78] sm:$0xff]
    %v313 = vld [vmem:[#allocation10 + $0x80] sm:$0xff]
    %v314 = vld [vmem:[#allocation10 + $0x88] sm:$0xff]
    %v315 = vld [vmem:[#allocation10 + $0x90] sm:$0xff]
    %v316 = vld [vmem:[#allocation10 + $0x98] sm:$0xff]
    %v317 = vld [vmem:[#allocation10 + $0xa0] sm:$0xff]
    %v318 = vld [vmem:[#allocation10 + $0xa8] sm:$0xff]
    %v319 = vld [vmem:[#allocation10 + $0xb0] sm:$0xff]
    %v320 = vld [vmem:[#allocation10 + $0xb8] sm:$0xff]
    %v321 = vld [vmem:[#allocation10 + $0xc0] sm:$0xff]
    %v322 = vld [vmem:[#allocation10 + $0xc8] sm:$0xff]
    %v323 = vld [vmem:[#allocation10 + $0xd0] sm:$0xff]
    %v324 = vld [vmem:[#allocation10 + $0xd8] sm:$0xff]
    %v325 = vld [vmem:[#allocation10 + $0xe0] sm:$0xff]
    %v326 = vld [vmem:[#allocation10 + $0xe8] sm:$0xff]
    %v327 = vld [vmem:[#allocation10 + $0xf0] sm:$0xff]
    %v328 = vld [vmem:[#allocation10 + $0xf8] sm:$0xff]
    %v329 = vld [vmem:[#allocation10 + $0x100] sm:$0xff]
    %v330 = vld [vmem:[#allocation10 + $0x108] sm:$0xff]
    %v331 = vld [vmem:[#allocation10 + $0x110] sm:$0xff]
    %v332 = vld [vmem:[#allocation10 + $0x118] sm:$0xff]
    %v333 = vld [vmem:[#allocation10 + $0x120] sm:$0xff]
    %v334 = vld [vmem:[#allocation10 + $0x128] sm:$0xff]
    %v335 = vld [vmem:[#allocation10 + $0x130] sm:$0xff]
    %v336 = vld [vmem:[#allocation10 + $0x138] sm:$0xff]
    %v337 = vld [vmem:[#allocation10 + $0x140] sm:$0xff]
    %v338 = vld [vmem:[#allocation10 + $0x148] sm:$0xff]
    %v339 = vld [vmem:[#allocation10 + $0x150] sm:$0xff]
    %v340 = vld [vmem:[#allocation10 + $0x158] sm:$0xff]
    %v341 = vld [vmem:[#allocation10 + $0x160] sm:$0xff]
    %v342 = vld [vmem:[#allocation10 + $0x168] sm:$0xff]
    %v343 = vld [vmem:[#allocation10 + $0x170] sm:$0xff]
    %v344 = vld [vmem:[#allocation10 + $0x178] sm:$0xff]
    %v345 = vld [vmem:[#allocation10 + $0x180] sm:$0xff]
    %v346 = vld [vmem:[#allocation10 + $0x188] sm:$0xff]
    %v347 = vld [vmem:[#allocation10 + $0x190] sm:$0xff]
    %v348 = vld [vmem:[#allocation10 + $0x198] sm:$0xff]
    %v349 = vld [vmem:[#allocation10 + $0x1a0] sm:$0xff]
    %v350 = vld [vmem:[#allocation10 + $0x1a8] sm:$0xff]
    %v351 = vld [vmem:[#allocation10 + $0x1b0] sm:$0xff]
    %v352 = vld [vmem:[#allocation10 + $0x1b8] sm:$0xff]
    %v353 = vld [vmem:[#allocation10 + $0x1c0] sm:$0xff]
    %v354 = vld [vmem:[#allocation10 + $0x1c8] sm:$0xff]
    %v355 = vld [vmem:[#allocation10 + $0x1d0] sm:$0xff]
    %v356 = vld [vmem:[#allocation10 + $0x1d8] sm:$0xff]
    %v357 = vld [vmem:[#allocation10 + $0x1e0] sm:$0xff]
    %v358 = vld [vmem:[#allocation10 + $0x1e8] sm:$0xff]
    %v359 = vld [vmem:[#allocation10 + $0x1f0] sm:$0xff]
    %v360 = vld [vmem:[#allocation10 + $0x1f8] sm:$0xff]
    %v361 = vld [vmem:[%s6] sm:$0xf]
    %v363 = vperm.slane %v361, 0
    %v364 = vperm.slane %v361, 1
    %v365 = vperm.slane %v361, 2
    %v366 = vperm.slane %v361, 3
    %v435 = vunpack.c.l.b16 %v297
    %v436 = vunpack.c.h.b16 %v297
    %v437 = vunpack.c.l.b16 %v298
    %v438 = vunpack.c.h.b16 %v298
    %v439 = vunpack.c.l.b16 %v299
    %v440 = vunpack.c.h.b16 %v299
    %v441 = vunpack.c.l.b16 %v300
    %v442 = vunpack.c.h.b16 %v300
    %v443 = vunpack.c.l.b16 %v301
    %v444 = vunpack.c.h.b16 %v301
    %v445 = vunpack.c.l.b16 %v302
    %v446 = vunpack.c.h.b16 %v302
    %v447 = vunpack.c.l.b16 %v303
    %v448 = vunpack.c.h.b16 %v303
    %v449 = vunpack.c.l.b16 %v304
    %v450 = vunpack.c.h.b16 %v304
    %v451 = vunpack.c.l.b16 %v305
    %v452 = vunpack.c.h.b16 %v305
    %v453 = vunpack.c.l.b16 %v306
    %v454 = vunpack.c.h.b16 %v306
    %v455 = vunpack.c.l.b16 %v307
    %v456 = vunpack.c.h.b16 %v307
    %v457 = vunpack.c.l.b16 %v308
    %v458 = vunpack.c.h.b16 %v308
    %v459 = vunpack.c.l.b16 %v309
    %v460 = vunpack.c.h.b16 %v309
    %v461 = vunpack.c.l.b16 %v310
    %v462 = vunpack.c.h.b16 %v310
    %v463 = vunpack.c.l.b16 %v311
    %v464 = vunpack.c.h.b16 %v311
    %v465 = vunpack.c.l.b16 %v312
    %v466 = vunpack.c.h.b16 %v312
    %v467 = vunpack.c.l.b16 %v313
    %v468 = vunpack.c.h.b16 %v313
    %v469 = vunpack.c.l.b16 %v314
    %v470 = vunpack.c.h.b16 %v314
    %v471 = vunpack.c.l.b16 %v315
    %v472 = vunpack.c.h.b16 %v315
    %v473 = vunpack.c.l.b16 %v316
    %v474 = vunpack.c.h.b16 %v316
    %v475 = vunpack.c.l.b16 %v317
    %v476 = vunpack.c.h.b16 %v317
    %v477 = vunpack.c.l.b16 %v318
    %v478 = vunpack.c.h.b16 %v318
    %v479 = vunpack.c.l.b16 %v319
    %v480 = vunpack.c.h.b16 %v319
    %v481 = vunpack.c.l.b16 %v320
    %v482 = vunpack.c.h.b16 %v320
    %v483 = vunpack.c.l.b16 %v321
    %v484 = vunpack.c.h.b16 %v321
    %v485 = vunpack.c.l.b16 %v322
    %v486 = vunpack.c.h.b16 %v322
    %v487 = vunpack.c.l.b16 %v323
    %v488 = vunpack.c.h.b16 %v323
    %v489 = vunpack.c.l.b16 %v324
    %v490 = vunpack.c.h.b16 %v324
    %v491 = vunpack.c.l.b16 %v325
    %v492 = vunpack.c.h.b16 %v325
    %v493 = vunpack.c.l.b16 %v326
    %v494 = vunpack.c.h.b16 %v326
    %v495 = vunpack.c.l.b16 %v327
    %v496 = vunpack.c.h.b16 %v327
    %v497 = vunpack.c.l.b16 %v328
    %v498 = vunpack.c.h.b16 %v328
    %v499 = vunpack.c.l.b16 %v329
    %v500 = vunpack.c.h.b16 %v329
    %v501 = vunpack.c.l.b16 %v330
    %v502 = vunpack.c.h.b16 %v330
    %v503 = vunpack.c.l.b16 %v331
    %v504 = vunpack.c.h.b16 %v331
    %v505 = vunpack.c.l.b16 %v332
    %v506 = vunpack.c.h.b16 %v332
    %v507 = vunpack.c.l.b16 %v333
    %v508 = vunpack.c.h.b16 %v333
    %v509 = vunpack.c.l.b16 %v334
    %v510 = vunpack.c.h.b16 %v334
    %v511 = vunpack.c.l.b16 %v335
    %v512 = vunpack.c.h.b16 %v335
    %v513 = vunpack.c.l.b16 %v336
    %v514 = vunpack.c.h.b16 %v336
    %v515 = vunpack.c.l.b16 %v337
    %v516 = vunpack.c.h.b16 %v337
    %v517 = vunpack.c.l.b16 %v338
    %v518 = vunpack.c.h.b16 %v338
    %v519 = vunpack.c.l.b16 %v339
    %v520 = vunpack.c.h.b16 %v339
    %v521 = vunpack.c.l.b16 %v340
    %v522 = vunpack.c.h.b16 %v340
    %v523 = vunpack.c.l.b16 %v341
    %v524 = vunpack.c.h.b16 %v341
    %v525 = vunpack.c.l.b16 %v342
    %v526 = vunpack.c.h.b16 %v342
    %v527 = vunpack.c.l.b16 %v343
    %v528 = vunpack.c.h.b16 %v343
    %v529 = vunpack.c.l.b16 %v344
    %v530 = vunpack.c.h.b16 %v344
    %v531 = vunpack.c.l.b16 %v345
    %v532 = vunpack.c.h.b16 %v345
    %v533 = vunpack.c.l.b16 %v346
    %v534 = vunpack.c.h.b16 %v346
    %v535 = vunpack.c.l.b16 %v347
    %v536 = vunpack.c.h.b16 %v347
    %v537 = vunpack.c.l.b16 %v348
    %v538 = vunpack.c.h.b16 %v348
    %v539 = vunpack.c.l.b16 %v349
    %v540 = vunpack.c.h.b16 %v349
    %v541 = vunpack.c.l.b16 %v350
    %v542 = vunpack.c.h.b16 %v350
    %v543 = vunpack.c.l.b16 %v351
    %v544 = vunpack.c.h.b16 %v351
    %v545 = vunpack.c.l.b16 %v352
    %v546 = vunpack.c.h.b16 %v352
    %v547 = vunpack.c.l.b16 %v353
    %v548 = vunpack.c.h.b16 %v353
    %v549 = vunpack.c.l.b16 %v354
    %v550 = vunpack.c.h.b16 %v354
    %v551 = vunpack.c.l.b16 %v355
    %v552 = vunpack.c.h.b16 %v355
    %v553 = vunpack.c.l.b16 %v356
    %v554 = vunpack.c.h.b16 %v356
    %v555 = vunpack.c.l.b16 %v357
    %v556 = vunpack.c.h.b16 %v357
    %v557 = vunpack.c.l.b16 %v358
    %v558 = vunpack.c.h.b16 %v358
    %v559 = vunpack.c.l.b16 %v359
    %v560 = vunpack.c.h.b16 %v359
    %v561 = vunpack.c.l.b16 %v360
    %v562 = vunpack.c.h.b16 %v360
    %v563 = vpack.c.b16 %v439, %v435
    %v564 = vpack.c.b16 %v440, %v436
    %v565 = vpack.c.b16 %v441, %v437
    %v566 = vpack.c.b16 %v442, %v438
    %v567 = vpack.c.b16 %v447, %v443
    %v568 = vpack.c.b16 %v448, %v444
    %v569 = vpack.c.b16 %v449, %v445
    %v570 = vpack.c.b16 %v450, %v446
    %v571 = vpack.c.b16 %v455, %v451
    %v572 = vpack.c.b16 %v456, %v452
    %v573 = vpack.c.b16 %v457, %v453
    %v574 = vpack.c.b16 %v458, %v454
    %v575 = vpack.c.b16 %v463, %v459
    %v576 = vpack.c.b16 %v464, %v460
    %v577 = vpack.c.b16 %v465, %v461
    %v578 = vpack.c.b16 %v466, %v462
    %v579 = vpack.c.b16 %v471, %v467
    %v580 = vpack.c.b16 %v472, %v468
    %v581 = vpack.c.b16 %v473, %v469
    %v582 = vpack.c.b16 %v474, %v470
    %v583 = vpack.c.b16 %v479, %v475
    %v584 = vpack.c.b16 %v480, %v476
    %v585 = vpack.c.b16 %v481, %v477
    %v586 = vpack.c.b16 %v482, %v478
    %v587 = vpack.c.b16 %v487, %v483
    %v588 = vpack.c.b16 %v488, %v484
    %v589 = vpack.c.b16 %v489, %v485
    %v590 = vpack.c.b16 %v490, %v486
    %v591 = vpack.c.b16 %v495, %v491
    %v592 = vpack.c.b16 %v496, %v492
    %v593 = vpack.c.b16 %v497, %v493
    %v594 = vpack.c.b16 %v498, %v494
    %v595 = vpack.c.b16 %v503, %v499
    %v596 = vpack.c.b16 %v504, %v500
    %v597 = vpack.c.b16 %v505, %v501
    %v598 = vpack.c.b16 %v506, %v502
    %v599 = vpack.c.b16 %v511, %v507
    %v600 = vpack.c.b16 %v512, %v508
    %v601 = vpack.c.b16 %v513, %v509
    %v602 = vpack.c.b16 %v514, %v510
    %v603 = vpack.c.b16 %v519, %v515
    %v604 = vpack.c.b16 %v520, %v516
    %v605 = vpack.c.b16 %v521, %v517
    %v606 = vpack.c.b16 %v522, %v518
    %v607 = vpack.c.b16 %v527, %v523
    %v608 = vpack.c.b16 %v528, %v524
    %v609 = vpack.c.b16 %v529, %v525
    %v610 = vpack.c.b16 %v530, %v526
    %v611 = vpack.c.b16 %v535, %v531
    %v612 = vpack.c.b16 %v536, %v532
    %v613 = vpack.c.b16 %v537, %v533
    %v614 = vpack.c.b16 %v538, %v534
    %v615 = vpack.c.b16 %v543, %v539
    %v616 = vpack.c.b16 %v544, %v540
    %v617 = vpack.c.b16 %v545, %v541
    %v618 = vpack.c.b16 %v546, %v542
    %v619 = vpack.c.b16 %v551, %v547
    %v620 = vpack.c.b16 %v552, %v548
    %v621 = vpack.c.b16 %v553, %v549
    %v622 = vpack.c.b16 %v554, %v550
    %v623 = vpack.c.b16 %v559, %v555
    %v624 = vpack.c.b16 %v560, %v556
    %v625 = vpack.c.b16 %v561, %v557
    %v626 = vpack.c.b16 %v562, %v558
    %691 = vmatpush.bf16.msra.mxu0 %v591
    %692 = vmatpush.bf16.msra.mxu0 %v587
    %693 = vmatpush.bf16.msra.mxu0 %v583
    %694 = vmatpush.bf16.msra.mxu0 %v579
    %695 = vmatpush.bf16.msra.mxu0 %v575
    %696 = vmatpush.bf16.msra.mxu0 %v571
    %697 = vmatpush.bf16.msra.mxu0 %v567
    %698 = vmatpush.bf16.msra.mxu0 %v563
    %699 = vmatmul.bf16.gmra.mxu0 %v295
    %v700 = vpop.f32.mrf.mxu0
    %v701 = vadd.f32 %v363, %v700
    %v702 = vpop.f32.mrf.mxu0
    %703 = vdwg.mxu0
    %704 = vmatpush.bf16.msra.mxu0 %v623
    %705 = vmatpush.bf16.msra.mxu0 %v619
    %706 = vmatpush.bf16.msra.mxu0 %v615
    %707 = vmatpush.bf16.msra.mxu0 %v611
    %708 = vmatpush.bf16.msra.mxu0 %v607
    %709 = vmatpush.bf16.msra.mxu0 %v603
    %710 = vmatpush.bf16.msra.mxu0 %v599
    %711 = vmatpush.bf16.msra.mxu0 %v595
    %712 = vmatmul.bf16.gmra.mxu0 %v296
    %v713 = vpop.f32.mrf.mxu0
    %v714 = vadd.f32 %v701, %v713
    %v715 = vpop.f32.mrf.mxu0
    %716 = vdwg.mxu0
    %717 = vmatpush.bf16.msra.mxu0 %v592
    %718 = vmatpush.bf16.msra.mxu0 %v588
    %719 = vmatpush.bf16.msra.mxu0 %v584
    %720 = vmatpush.bf16.msra.mxu0 %v580
    %721 = vmatpush.bf16.msra.mxu0 %v576
    %722 = vmatpush.bf16.msra.mxu0 %v572
    %723 = vmatpush.bf16.msra.mxu0 %v568
    %724 = vmatpush.bf16.msra.mxu0 %v564
    %725 = vmatmul.bf16.gmra.mxu0 %v295
    %v726 = vpop.f32.mrf.mxu0
    %v727 = vadd.f32 %v364, %v726
    %v728 = vpop.f32.mrf.mxu0
    %729 = vdwg.mxu0
    %730 = vmatpush.bf16.msra.mxu0 %v624
    %731 = vmatpush.bf16.msra.mxu0 %v620
    %732 = vmatpush.bf16.msra.mxu0 %v616
    %733 = vmatpush.bf16.msra.mxu0 %v612
    %734 = vmatpush.bf16.msra.mxu0 %v608
    %735 = vmatpush.bf16.msra.mxu0 %v604
    %736 = vmatpush.bf16.msra.mxu0 %v600
    %737 = vmatpush.bf16.msra.mxu0 %v596
    %738 = vmatmul.bf16.gmra.mxu0 %v296
    %v739 = vpop.f32.mrf.mxu0
    %v740 = vadd.f32 %v727, %v739
    %v741 = vpop.f32.mrf.mxu0
    %742 = vdwg.mxu0
    %743 = vmatpush.bf16.msra.mxu0 %v593
    %744 = vmatpush.bf16.msra.mxu0 %v589
    %745 = vmatpush.bf16.msra.mxu0 %v585
    %746 = vmatpush.bf16.msra.mxu0 %v581
    %747 = vmatpush.bf16.msra.mxu0 %v577
    %748 = vmatpush.bf16.msra.mxu0 %v573
    %749 = vmatpush.bf16.msra.mxu0 %v569
    %750 = vmatpush.bf16.msra.mxu0 %v565
    %751 = vmatmul.bf16.gmra.mxu0 %v295
    %v752 = vpop.f32.mrf.mxu0
    %v753 = vadd.f32 %v365, %v752
    %v754 = vpop.f32.mrf.mxu0
    %755 = vdwg.mxu0
    %756 = vmatpush.bf16.msra.mxu0 %v625
    %757 = vmatpush.bf16.msra.mxu0 %v621
    %758 = vmatpush.bf16.msra.mxu0 %v617
    %759 = vmatpush.bf16.msra.mxu0 %v613
    %760 = vmatpush.bf16.msra.mxu0 %v609
    %761 = vmatpush.bf16.msra.mxu0 %v605
    %762 = vmatpush.bf16.msra.mxu0 %v601
    %763 = vmatpush.bf16.msra.mxu0 %v597
    %764 = vmatmul.bf16.gmra.mxu0 %v296
    %v765 = vpop.f32.mrf.mxu0
    %v766 = vadd.f32 %v753, %v765
    %v767 = vpop.f32.mrf.mxu0
    %768 = vdwg.mxu0
    %769 = vmatpush.bf16.msra.mxu0 %v594
    %770 = vmatpush.bf16.msra.mxu0 %v590
    %771 = vmatpush.bf16.msra.mxu0 %v586
    %772 = vmatpush.bf16.msra.mxu0 %v582
    %773 = vmatpush.bf16.msra.mxu0 %v578
    %774 = vmatpush.bf16.msra.mxu0 %v574
    %775 = vmatpush.bf16.msra.mxu0 %v570
    %776 = vmatpush.bf16.msra.mxu0 %v566
    %777 = vmatmul.bf16.gmra.mxu0 %v295
    %v778 = vpop.f32.mrf.mxu0
    %v779 = vadd.f32 %v366, %v778
    %v780 = vpop.f32.mrf.mxu0
    %781 = vdwg.mxu0
    %782 = vmatpush.bf16.msra.mxu0 %v626
    %783 = vmatpush.bf16.msra.mxu0 %v622
    %784 = vmatpush.bf16.msra.mxu0 %v618
    %785 = vmatpush.bf16.msra.mxu0 %v614
    %786 = vmatpush.bf16.msra.mxu0 %v610
    %787 = vmatpush.bf16.msra.mxu0 %v606
    %788 = vmatpush.bf16.msra.mxu0 %v602
    %789 = vmatpush.bf16.msra.mxu0 %v598
    %790 = vmatmul.bf16.gmra.mxu0 %v296
    %v791 = vpop.f32.mrf.mxu0
    %v792 = vadd.f32 %v779, %v791
    %v793 = vpop.f32.mrf.mxu0
    %794 = vdwg.mxu0
    %v795 = vmax.f32 %v714, 0.0
    %v796 = vmax.f32 %v740, 0.0
    %v797 = vmax.f32 %v766, 0.0
    %v798 = vmax.f32 %v792, 0.0
    %v799 = vpack.c.bf16 %v795, %v795
    %v800 = vpack.c.bf16 %v796, %v796
    %v801 = vpack.c.bf16 %v797, %v797
    %v802 = vpack.c.bf16 %v798, %v798
    %v803 = vld [vmem:[#allocation11] sm:$0xf]
    %v804 = vld [vmem:[#allocation11 + $0x4] sm:$0xf]
    %v805 = vld [vmem:[#allocation11 + $0x8] sm:$0xf]
    %v806 = vld [vmem:[#allocation11 + $0xc] sm:$0xf]
    %v807 = vld [vmem:[#allocation11 + $0x10] sm:$0xf]
    %v808 = vld [vmem:[#allocation11 + $0x14] sm:$0xf]
    %v809 = vld [vmem:[#allocation11 + $0x18] sm:$0xf]
    %v810 = vld [vmem:[#allocation11 + $0x1c] sm:$0xf]
    %v811 = vld [vmem:[#allocation11 + $0x20] sm:$0xf]
    %v812 = vld [vmem:[#allocation11 + $0x24] sm:$0xf]
    %v813 = vld [vmem:[#allocation11 + $0x28] sm:$0xf]
    %v814 = vld [vmem:[#allocation11 + $0x2c] sm:$0xf]
    %v815 = vld [vmem:[#allocation11 + $0x30] sm:$0xf]
    %v816 = vld [vmem:[#allocation11 + $0x34] sm:$0xf]
    %v817 = vld [vmem:[#allocation11 + $0x38] sm:$0xf]
    %v818 = vld [vmem:[#allocation11 + $0x3c] sm:$0xf]
    %v819 = vld [vmem:[#allocation11 + $0x40] sm:$0xf]
    %v820 = vld [vmem:[#allocation11 + $0x44] sm:$0xf]
    %v821 = vld [vmem:[#allocation11 + $0x48] sm:$0xf]
    %v822 = vld [vmem:[#allocation11 + $0x4c] sm:$0xf]
    %v823 = vld [vmem:[#allocation11 + $0x50] sm:$0xf]
    %v824 = vld [vmem:[#allocation11 + $0x54] sm:$0xf]
    %v825 = vld [vmem:[#allocation11 + $0x58] sm:$0xf]
    %v826 = vld [vmem:[#allocation11 + $0x5c] sm:$0xf]
    %v827 = vld [vmem:[#allocation11 + $0x60] sm:$0xf]
    %v828 = vld [vmem:[#allocation11 + $0x64] sm:$0xf]
    %v829 = vld [vmem:[#allocation11 + $0x68] sm:$0xf]
    %v830 = vld [vmem:[#allocation11 + $0x6c] sm:$0xf]
    %v831 = vld [vmem:[#allocation11 + $0x70] sm:$0xf]
    %v832 = vld [vmem:[#allocation11 + $0x74] sm:$0xf]
    %v833 = vld [vmem:[#allocation11 + $0x78] sm:$0xf]
    %v834 = vld [vmem:[#allocation11 + $0x7c] sm:$0xf]
    %v835 = vld [vmem:[#allocation11 + $0x80] sm:$0xf]
    %v836 = vld [vmem:[#allocation11 + $0x84] sm:$0xf]
    %v837 = vld [vmem:[#allocation11 + $0x88] sm:$0xf]
    %v838 = vld [vmem:[#allocation11 + $0x8c] sm:$0xf]
    %v839 = vld [vmem:[#allocation11 + $0x90] sm:$0xf]
    %v840 = vld [vmem:[#allocation11 + $0x94] sm:$0xf]
    %v841 = vld [vmem:[#allocation11 + $0x98] sm:$0xf]
    %v842 = vld [vmem:[#allocation11 + $0x9c] sm:$0xf]
    %v843 = vld [vmem:[#allocation11 + $0xa0] sm:$0xf]
    %v844 = vld [vmem:[#allocation11 + $0xa4] sm:$0xf]
    %v845 = vld [vmem:[#allocation11 + $0xa8] sm:$0xf]
    %v846 = vld [vmem:[#allocation11 + $0xac] sm:$0xf]
    %v847 = vld [vmem:[#allocation11 + $0xb0] sm:$0xf]
    %v848 = vld [vmem:[#allocation11 + $0xb4] sm:$0xf]
    %v849 = vld [vmem:[#allocation11 + $0xb8] sm:$0xf]
    %v850 = vld [vmem:[#allocation11 + $0xbc] sm:$0xf]
    %v851 = vld [vmem:[#allocation11 + $0xc0] sm:$0xf]
    %v852 = vld [vmem:[#allocation11 + $0xc4] sm:$0xf]
    %v853 = vld [vmem:[#allocation11 + $0xc8] sm:$0xf]
    %v854 = vld [vmem:[#allocation11 + $0xcc] sm:$0xf]
    %v855 = vld [vmem:[#allocation11 + $0xd0] sm:$0xf]
    %v856 = vld [vmem:[#allocation11 + $0xd4] sm:$0xf]
    %v857 = vld [vmem:[#allocation11 + $0xd8] sm:$0xf]
    %v858 = vld [vmem:[#allocation11 + $0xdc] sm:$0xf]
    %v859 = vld [vmem:[#allocation11 + $0xe0] sm:$0xf]
    %v860 = vld [vmem:[#allocation11 + $0xe4] sm:$0xf]
    %v861 = vld [vmem:[#allocation11 + $0xe8] sm:$0xf]
    %v862 = vld [vmem:[#allocation11 + $0xec] sm:$0xf]
    %v863 = vld [vmem:[#allocation11 + $0xf0] sm:$0xf]
    %v864 = vld [vmem:[#allocation11 + $0xf4] sm:$0xf]
    %v865 = vld [vmem:[#allocation11 + $0xf8] sm:$0xf]
    %v866 = vld [vmem:[#allocation11 + $0xfc] sm:$0xf]
    %v867 = vld [vmem:[%s8] sm:$0x1]
    %v869 = vperm.slane %v867, 0
    %v935 = vunpack.c.l.b16 %v803
    %v936 = vunpack.c.l.b16 %v804
    %v937 = vunpack.c.l.b16 %v805
    %v938 = vunpack.c.l.b16 %v806
    %v939 = vunpack.c.l.b16 %v807
    %v940 = vunpack.c.l.b16 %v808
    %v941 = vunpack.c.l.b16 %v809
    %v942 = vunpack.c.l.b16 %v810
    %v943 = vunpack.c.l.b16 %v811
    %v944 = vunpack.c.l.b16 %v812
    %v945 = vunpack.c.l.b16 %v813
    %v946 = vunpack.c.l.b16 %v814
    %v947 = vunpack.c.l.b16 %v815
    %v948 = vunpack.c.l.b16 %v816
    %v949 = vunpack.c.l.b16 %v817
    %v950 = vunpack.c.l.b16 %v818
    %v951 = vunpack.c.l.b16 %v819
    %v952 = vunpack.c.l.b16 %v820
    %v953 = vunpack.c.l.b16 %v821
    %v954 = vunpack.c.l.b16 %v822
    %v955 = vunpack.c.l.b16 %v823
    %v956 = vunpack.c.l.b16 %v824
    %v957 = vunpack.c.l.b16 %v825
    %v958 = vunpack.c.l.b16 %v826
    %v959 = vunpack.c.l.b16 %v827
    %v960 = vunpack.c.l.b16 %v828
    %v961 = vunpack.c.l.b16 %v829
    %v962 = vunpack.c.l.b16 %v830
    %v963 = vunpack.c.l.b16 %v831
    %v964 = vunpack.c.l.b16 %v832
    %v965 = vunpack.c.l.b16 %v833
    %v966 = vunpack.c.l.b16 %v834
    %v967 = vunpack.c.l.b16 %v835
    %v968 = vunpack.c.l.b16 %v836
    %v969 = vunpack.c.l.b16 %v837
    %v970 = vunpack.c.l.b16 %v838
    %v971 = vunpack.c.l.b16 %v839
    %v972 = vunpack.c.l.b16 %v840
    %v973 = vunpack.c.l.b16 %v841
    %v974 = vunpack.c.l.b16 %v842
    %v975 = vunpack.c.l.b16 %v843
    %v976 = vunpack.c.l.b16 %v844
    %v977 = vunpack.c.l.b16 %v845
    %v978 = vunpack.c.l.b16 %v846
    %v979 = vunpack.c.l.b16 %v847
    %v980 = vunpack.c.l.b16 %v848
    %v981 = vunpack.c.l.b16 %v849
    %v982 = vunpack.c.l.b16 %v850
    %v983 = vunpack.c.l.b16 %v851
    %v984 = vunpack.c.l.b16 %v852
    %v985 = vunpack.c.l.b16 %v853
    %v986 = vunpack.c.l.b16 %v854
    %v987 = vunpack.c.l.b16 %v855
    %v988 = vunpack.c.l.b16 %v856
    %v989 = vunpack.c.l.b16 %v857
    %v990 = vunpack.c.l.b16 %v858
    %v991 = vunpack.c.l.b16 %v859
    %v992 = vunpack.c.l.b16 %v860
    %v993 = vunpack.c.l.b16 %v861
    %v994 = vunpack.c.l.b16 %v862
    %v995 = vunpack.c.l.b16 %v863
    %v996 = vunpack.c.l.b16 %v864
    %v997 = vunpack.c.l.b16 %v865
    %v998 = vunpack.c.l.b16 %v866
    %v999 = vpack.c.b16 %v936, %v935
    %v1000 = vpack.c.b16 %v938, %v937
    %v1001 = vpack.c.b16 %v940, %v939
    %v1002 = vpack.c.b16 %v942, %v941
    %v1003 = vpack.c.b16 %v944, %v943
    %v1004 = vpack.c.b16 %v946, %v945
    %v1005 = vpack.c.b16 %v948, %v947
    %v1006 = vpack.c.b16 %v950, %v949
    %v1007 = vpack.c.b16 %v952, %v951
    %v1008 = vpack.c.b16 %v954, %v953
    %v1009 = vpack.c.b16 %v956, %v955
    %v1010 = vpack.c.b16 %v958, %v957
    %v1011 = vpack.c.b16 %v960, %v959
    %v1012 = vpack.c.b16 %v962, %v961
    %v1013 = vpack.c.b16 %v964, %v963
    %v1014 = vpack.c.b16 %v966, %v965
    %v1015 = vpack.c.b16 %v968, %v967
    %v1016 = vpack.c.b16 %v970, %v969
    %v1017 = vpack.c.b16 %v972, %v971
    %v1018 = vpack.c.b16 %v974, %v973
    %v1019 = vpack.c.b16 %v976, %v975
    %v1020 = vpack.c.b16 %v978, %v977
    %v1021 = vpack.c.b16 %v980, %v979
    %v1022 = vpack.c.b16 %v982, %v981
    %v1023 = vpack.c.b16 %v984, %v983
    %v1024 = vpack.c.b16 %v986, %v985
    %v1025 = vpack.c.b16 %v988, %v987
    %v1026 = vpack.c.b16 %v990, %v989
    %v1027 = vpack.c.b16 %v992, %v991
    %v1028 = vpack.c.b16 %v994, %v993
    %v1029 = vpack.c.b16 %v996, %v995
    %v1030 = vpack.c.b16 %v998, %v997
    %1063 = vmatpush.bf16.msra.mxu0 %v1006
    %1064 = vmatpush.bf16.msra.mxu0 %v1005
    %1065 = vmatpush.bf16.msra.mxu0 %v1004
    %1066 = vmatpush.bf16.msra.mxu0 %v1003
    %1067 = vmatpush.bf16.msra.mxu0 %v1002
    %1068 = vmatpush.bf16.msra.mxu0 %v1001
    %1069 = vmatpush.bf16.msra.mxu0 %v1000
    %1070 = vmatpush.bf16.msra.mxu0 %v999
    %1071 = vmatmul.bf16.gmra.mxu0 %v799
    %v1072 = vpop.f32.mrf.mxu0
    %v1073 = vadd.f32 %v869, %v1072
    %v1074 = vpop.f32.mrf.mxu0
    %1075 = vdwg.mxu0
    %1076 = vmatpush.bf16.msra.mxu0 %v1014
    %1077 = vmatpush.bf16.msra.mxu0 %v1013
    %1078 = vmatpush.bf16.msra.mxu0 %v1012
    %1079 = vmatpush.bf16.msra.mxu0 %v1011
    %1080 = vmatpush.bf16.msra.mxu0 %v1010
    %1081 = vmatpush.bf16.msra.mxu0 %v1009
    %1082 = vmatpush.bf16.msra.mxu0 %v1008
    %1083 = vmatpush.bf16.msra.mxu0 %v1007
    %1084 = vmatmul.bf16.gmra.mxu0 %v800
    %v1085 = vpop.f32.mrf.mxu0
    %v1086 = vadd.f32 %v1073, %v1085
    %v1087 = vpop.f32.mrf.mxu0
    %1088 = vdwg.mxu0
    %1089 = vmatpush.bf16.msra.mxu0 %v1022
    %1090 = vmatpush.bf16.msra.mxu0 %v1021
    %1091 = vmatpush.bf16.msra.mxu0 %v1020
    %1092 = vmatpush.bf16.msra.mxu0 %v1019
    %1093 = vmatpush.bf16.msra.mxu0 %v1018
    %1094 = vmatpush.bf16.msra.mxu0 %v1017
    %1095 = vmatpush.bf16.msra.mxu0 %v1016
    %1096 = vmatpush.bf16.msra.mxu0 %v1015
    %1097 = vmatmul.bf16.gmra.mxu0 %v801
    %v1098 = vpop.f32.mrf.mxu0
    %v1099 = vadd.f32 %v1086, %v1098
    %v1100 = vpop.f32.mrf.mxu0
    %1101 = vdwg.mxu0
    %1102 = vmatpush.bf16.msra.mxu0 %v1030
    %1103 = vmatpush.bf16.msra.mxu0 %v1029
    %1104 = vmatpush.bf16.msra.mxu0 %v1028
    %1105 = vmatpush.bf16.msra.mxu0 %v1027
    %1106 = vmatpush.bf16.msra.mxu0 %v1026
    %1107 = vmatpush.bf16.msra.mxu0 %v1025
    %1108 = vmatpush.bf16.msra.mxu0 %v1024
    %1109 = vmatpush.bf16.msra.mxu0 %v1023
    %1110 = vmatmul.bf16.gmra.mxu0 %v802
    %v1111 = vpop.f32.mrf.mxu0
    %v1112 = vadd.f32 %v1099, %v1111
    %v1113 = vpop.f32.mrf.mxu0
    %1114 = vdwg.mxu0
    %v1115 = vtanh.pop %v1112
    %1116 = vst [vmem:[#allocation13] sm:$0xff] %v1115
    // Predicated region
    $region62: #{_generator_forward.1} parent=1 // pred_check
      _
    $region63: #{_generator_forward.1} parent=1 // pred_check_branch
      %1118 = sbr.rel (0) target = $region65
    $region64: #{_generator_forward.1} parent=1 // pred_region
      %1120 = vsyncadd [#allocation4], 0
      %s1122 = sshll.u32 [#allocation13], 4
      %s1123 = int_to_ptr.vmem [resolvable:$true] %s1122
      %s1124 = sshll.u32 %s9, 4
      %s1125 = int_to_ptr.hbm [resolvable:$true] %s1124
      %1127 = dma.vmem_to_hbm [thread:$0]  %s1123, 128, %s1125, [#allocation4]
    $region65: #{_generator_forward.1} parent=1 // pred_fallthru
      _
    // Predicated region
    $region66: #{_generator_forward.1} parent=1 // pred_check
      _
    $region67: #{_generator_forward.1} parent=1 // pred_check_branch
      %1129 = sbr.rel (0) target = $region69
    $region68: #{_generator_forward.1} parent=1 // pred_region
      %1131 = dma.done [#allocation4], 128
    $region69: #{_generator_forward.1} parent=1 // pred_fallthru
      _
    %1132 = vsyncpa [#allocation3], 1
    %1133 = vsyncpa [#allocation6], 1
    %1134 = vsyncpa [#allocation9], 1
    %1135 = vsyncpa [#allocation12], 1
    %1136 = vsyncpa [#allocation4], 1

</llo_original>
